<compile_context>
chip_gen: v6e
topology: v6e:2x2x1
jax: 0.10.0
libtpu: 0.0.40
codegen_flags: <defaults>
</compile_context>

<pallas_src>
import functools

import jax
import jax.numpy as jnp
from jax import lax
from jax.experimental import pallas as pl
from jax.experimental.pallas import tpu as pltpu


def _cdiv(a, b):
    return -(-a // b)


def _round_up(x, m):
    return _cdiv(x, m) * m


def _row_sum_mxu(p_f32, ones_bf16):
    """Last-axis sum of a (tb, D) f32 array, computed on the MXU.

    The f32 values are split exactly into hi + lo bf16 parts; two
    DEFAULT-precision bf16 matmuls against ones(D, 128) with f32 accumulation
    reproduce the f32 row-sum to ~1e-6 relative accuracy while using only
    2 MXU passes (vs ~6 for precision=HIGHEST on f32 operands).

    Returns (tb, 128) with the row-sum replicated across all 128 lanes.
    """
    p_hi = p_f32.astype(jnp.bfloat16)
    p_lo = (p_f32 - p_hi.astype(jnp.float32)).astype(jnp.bfloat16)  # exact residual
    dn = (((1,), (0,)), ((), ()))
    s_hi = lax.dot_general(p_hi, ones_bf16, dn, preferred_element_type=jnp.float32)
    s_lo = lax.dot_general(p_lo, ones_bf16, dn, preferred_element_type=jnp.float32)
    return s_hi + s_lo


def _byol_loss_kernel(p1_ref, z2_ref, p2_ref, z1_ref, ones_ref, out_ref,
                      *, batch, tile_b, mask_tail):
    # torch.nn.functional.normalize clamps the norm at eps=1e-12; clamping the
    # squared norm at eps^2 = 1e-24 (normal in f32) is equivalent.
    eps2 = 1e-24
    ones_bf16 = ones_ref[...]  # (D, 128) bf16, resident across all grid steps

    def cos_rows(a_ref, b_ref):
        a = a_ref[...].astype(jnp.float32)
        b = b_ref[...].astype(jnp.float32)
        ss_a = _row_sum_mxu(a * a, ones_bf16)   # (tile_b, 128)
        ss_b = _row_sum_mxu(b * b, ones_bf16)   # (tile_b, 128)
        dot = _row_sum_mxu(a * b, ones_bf16)    # (tile_b, 128)
        # rsqrt(max(ssa,e)*max(ssb,e)) == rsqrt(max(ssa,e))*rsqrt(max(ssb,e)):
        # one EUP rsqrt per pair instead of two.
        inv = lax.rsqrt(jnp.maximum(ss_a, eps2) * jnp.maximum(ss_b, eps2))
        return dot * inv                        # cosine, replicated across lanes

    cos = cos_rows(p1_ref, z2_ref) + cos_rows(p2_ref, z1_ref)  # (tile_b, 128)

    if mask_tail:
        # Last block may extend past the true batch; those rows hold
        # unspecified data.  Select (not multiply) so NaN/Inf cannot leak in.
        row = pl.program_id(0) * tile_b + lax.broadcasted_iota(jnp.int32, cos.shape, 0)
        cos = jnp.where(row < batch, cos, 0.0)

    # Per-tile partial sum of (cos1 + cos2); lanes are replicated so every lane
    # (and every broadcast sublane) of the output block holds the same value.
    partial_lanes = jnp.sum(cos, axis=0)                      # (128,)
    out_ref[...] = jnp.broadcast_to(partial_lanes, out_ref.shape)


def _choose_batch_tile(B, D, itemsize):
    # ~2 MiB per input block: 4 inputs x 2 buffers x 2 MiB = 16 MiB of pipeline
    # buffers, leaving room for in-kernel temporaries under the 48 MiB limit,
    # while keeping the ~0.35 us per-step overhead negligible even on v7x.
    target_bytes = 2 << 20
    tb = max(8, min(4096, (target_bytes // max(1, D * itemsize)) // 8 * 8))
    # Never allocate blocks (much) larger than the batch itself.
    tb = min(tb, _round_up(B, 8))
    # Prefer >= 2 tiles so the "parallel" axis can use both v7x TensorCores.
    if B > 8 and _cdiv(B, tb) < 2:
        tb = max(8, _round_up(_cdiv(B, 2), 8))
    # Prefer an even tile count (load-balance across 2 TCs on v7x).
    n = _cdiv(B, tb)
    if n > 2 and n % 2 == 1:
        tb_even = max(8, _round_up(_cdiv(B, n + 1), 8))
        if _cdiv(B, tb_even) % 2 == 0:
            tb = tb_even
    return tb


def byol_loss(p1, z2, p2, z1):
    """Pallas TPU implementation of BYOLLoss.forward. Returns scalar f32.

    Accepts f32 or bf16 inputs (the kernel upcasts to f32 before the products).
    """
    assert p1.shape == z2.shape == p2.shape == z1.shape
    assert p1.ndim == 2
    B, D = p1.shape

    tb = _choose_batch_tile(B, D, jnp.dtype(p1.dtype).itemsize)
    num_tiles = _cdiv(B, tb)
    mask_tail = (B % tb) != 0  # static: mask only compiled in when needed

    # Reduction matrix for the MXU lane-sums (exactly representable in bf16).
    ones_red = jnp.ones((D, 128), jnp.bfloat16)

    kernel = functools.partial(_byol_loss_kernel, batch=B, tile_b=tb,
                               mask_tail=mask_tail)

    in_spec = pl.BlockSpec((tb, D), lambda i: (i, 0))
    ones_spec = pl.BlockSpec((D, 128), lambda i: (0, 0))  # fetched once, stays resident

    partials = pl.pallas_call(
        kernel,
        out_shape=jax.ShapeDtypeStruct((num_tiles, 8, 128), jnp.float32),
        grid_spec=pltpu.PrefetchScalarGridSpec(
            num_scalar_prefetch=0,
            grid=(num_tiles,),
            in_specs=[in_spec, in_spec, in_spec, in_spec, ones_spec],
            out_specs=pl.BlockSpec((1, 8, 128), lambda i: (i, 0, 0)),
        ),
        compiler_params=pltpu.CompilerParams(
            dimension_semantics=("parallel",),
            vmem_limit_bytes=48 * 1024 * 1024,
        ),
    )(p1, z2, p2, z1, ones_red)

    # Every lane/sublane of a tile's block holds the identical partial sum.
    total_cos = jnp.sum(partials[:, 0, 0])
    # loss_i = (2 - 2*cos1_i) + (2 - 2*cos2_i); mean over the TRUE batch size B.
    return 4.0 - 2.0 * total_cos / jnp.float32(B)


def byol_loss_ref(p1, z2, p2, z1):
    """Pure-JAX reference (mirrors the PyTorch module)."""
    eps = 1e-12

    def normalize(x):
        n = jnp.maximum(jnp.linalg.norm(x, axis=-1, keepdims=True), eps)
        return x / n

    l1 = 2.0 - 2.0 * jnp.sum(normalize(p1) * normalize(z2), axis=-1)
    l2 = 2.0 - 2.0 * jnp.sum(normalize(p2) * normalize(z1), axis=-1)
    return jnp.mean(l1 + l2)


def _make_inputs(key, B, D):
    k1, k2, k3, k4 = jax.random.split(key, 4)
    return (
        jax.random.normal(k1, (B, D), dtype=jnp.float32),
        jax.random.normal(k2, (B, D), dtype=jnp.float32),
        jax.random.normal(k3, (B, D), dtype=jnp.float32),
        jax.random.normal(k4, (B, D), dtype=jnp.float32),
    )


if __name__ == "__main__":
    root = jax.random.PRNGKey(0)
    k0, k1, k2 = jax.random.split(root, 3)

    # Small, (8,128)-aligned case (single tile).
    p1, z2, p2, z1 = _make_inputs(k0, 8, 128)
    loss = byol_loss(p1, z2, p2, z1)
    jax.block_until_ready(loss)
    ref = byol_loss_ref(p1, z2, p2, z1)
    assert jnp.allclose(loss, ref, atol=1e-5, rtol=1e-5), (loss, ref)

    # Two-tile case (exercises the parallel grid axis; no tail masking).
    p1, z2, p2, z1 = _make_inputs(k1, 256, 256)
    loss = byol_loss(p1, z2, p2, z1)
    jax.block_until_ready(loss)
    ref = byol_loss_ref(p1, z2, p2, z1)
    assert jnp.allclose(loss, ref, atol=1e-5, rtol=1e-5), (loss, ref)

    # Ragged batch case (exercises in-kernel tail masking, no jnp.pad path).
    p1, z2, p2, z1 = _make_inputs(k2, 12, 128)
    loss = byol_loss(p1, z2, p2, z1)
    jax.block_until_ready(loss)
    ref = byol_loss_ref(p1, z2, p2, z1)
    assert jnp.allclose(loss, ref, atol=1e-5, rtol=1e-5), (loss, ref)

    print("KERNEL_OK")
</pallas_src>

<mosaic_0001>
module attributes {stable_mosaic.version = 11 : i64} {
  func.func @_byol_loss_kernel(%arg0: i32, %arg1: memref<8x128xf32, #tpu.memory_space<vmem>>, %arg2: memref<8x128xf32, #tpu.memory_space<vmem>>, %arg3: memref<8x128xf32, #tpu.memory_space<vmem>>, %arg4: memref<8x128xf32, #tpu.memory_space<vmem>>, %arg5: memref<128x128xbf16, #tpu.memory_space<vmem>>, %arg6: memref<1x8x128xf32, #tpu.memory_space<vmem>>) attributes {dimension_semantics = [#tpu.dimension_semantics<parallel>], iteration_bounds = array<i64: 1>, scalar_prefetch = 0 : i64, scratch_operands = 0 : i64, tpu.core_type = #tpu.core_type<tc>, window_params = [{transform_indices = @transform_0, window_bounds = array<i64: 8, 128>}, {transform_indices = @transform_1, window_bounds = array<i64: 8, 128>}, {transform_indices = @transform_2, window_bounds = array<i64: 8, 128>}, {transform_indices = @transform_3, window_bounds = array<i64: 8, 128>}, {pipeline_mode = #tpu.pipeline_mode<synchronous>, transform_indices = @transform_4, window_bounds = array<i64: 128, 128>}, {transform_indices = @transform_5, window_bounds = array<i64: 1, 8, 128>}]} {
    %c0 = arith.constant 0 : index
    %c0_0 = arith.constant 0 : index
    %0 = vector.load %arg5[%c0, %c0_0] : memref<128x128xbf16, #tpu.memory_space<vmem>>, vector<128x128xbf16>
    %c0_1 = arith.constant 0 : index
    %c0_2 = arith.constant 0 : index
    %1 = vector.load %arg1[%c0_1, %c0_2] : memref<8x128xf32, #tpu.memory_space<vmem>>, vector<8x128xf32>
    %c0_3 = arith.constant 0 : index
    %c0_4 = arith.constant 0 : index
    %2 = vector.load %arg2[%c0_3, %c0_4] : memref<8x128xf32, #tpu.memory_space<vmem>>, vector<8x128xf32>
    %3 = arith.mulf %1, %1 : vector<8x128xf32>
    %4 = arith.truncf %3 : vector<8x128xf32> to vector<8x128xbf16>
    %5 = arith.extf %4 : vector<8x128xbf16> to vector<8x128xf32>
    %6 = arith.subf %3, %5 : vector<8x128xf32>
    %7 = arith.truncf %6 : vector<8x128xf32> to vector<8x128xbf16>
    %cst = arith.constant dense<0.000000e+00> : vector<8x128xf32>
    %8 = tpu.matmul %4, %0, %cst {dimension_numbers = #tpu.dot_dimension_numbers<[1], [0], [0], [1], [0, 0, 1, 1], [], []>} : vector<8x128xbf16>, vector<128x128xbf16>, vector<8x128xf32> -> vector<8x128xf32>
    %cst_5 = arith.constant dense<0.000000e+00> : vector<8x128xf32>
    %9 = tpu.matmul %7, %0, %cst_5 {dimension_numbers = #tpu.dot_dimension_numbers<[1], [0], [0], [1], [0, 0, 1, 1], [], []>} : vector<8x128xbf16>, vector<128x128xbf16>, vector<8x128xf32> -> vector<8x128xf32>
    %10 = arith.addf %8, %9 : vector<8x128xf32>
    %11 = arith.mulf %2, %2 : vector<8x128xf32>
    %12 = arith.truncf %11 : vector<8x128xf32> to vector<8x128xbf16>
    %13 = arith.extf %12 : vector<8x128xbf16> to vector<8x128xf32>
    %14 = arith.subf %11, %13 : vector<8x128xf32>
    %15 = arith.truncf %14 : vector<8x128xf32> to vector<8x128xbf16>
    %cst_6 = arith.constant dense<0.000000e+00> : vector<8x128xf32>
    %16 = tpu.matmul %12, %0, %cst_6 {dimension_numbers = #tpu.dot_dimension_numbers<[1], [0], [0], [1], [0, 0, 1, 1], [], []>} : vector<8x128xbf16>, vector<128x128xbf16>, vector<8x128xf32> -> vector<8x128xf32>
    %cst_7 = arith.constant dense<0.000000e+00> : vector<8x128xf32>
    %17 = tpu.matmul %15, %0, %cst_7 {dimension_numbers = #tpu.dot_dimension_numbers<[1], [0], [0], [1], [0, 0, 1, 1], [], []>} : vector<8x128xbf16>, vector<128x128xbf16>, vector<8x128xf32> -> vector<8x128xf32>
    %18 = arith.addf %16, %17 : vector<8x128xf32>
    %19 = arith.mulf %1, %2 : vector<8x128xf32>
    %20 = arith.truncf %19 : vector<8x128xf32> to vector<8x128xbf16>
    %21 = arith.extf %20 : vector<8x128xbf16> to vector<8x128xf32>
    %22 = arith.subf %19, %21 : vector<8x128xf32>
    %23 = arith.truncf %22 : vector<8x128xf32> to vector<8x128xbf16>
    %cst_8 = arith.constant dense<0.000000e+00> : vector<8x128xf32>
    %24 = tpu.matmul %20, %0, %cst_8 {dimension_numbers = #tpu.dot_dimension_numbers<[1], [0], [0], [1], [0, 0, 1, 1], [], []>} : vector<8x128xbf16>, vector<128x128xbf16>, vector<8x128xf32> -> vector<8x128xf32>
    %cst_9 = arith.constant dense<0.000000e+00> : vector<8x128xf32>
    %25 = tpu.matmul %23, %0, %cst_9 {dimension_numbers = #tpu.dot_dimension_numbers<[1], [0], [0], [1], [0, 0, 1, 1], [], []>} : vector<8x128xbf16>, vector<128x128xbf16>, vector<8x128xf32> -> vector<8x128xf32>
    %26 = arith.addf %24, %25 : vector<8x128xf32>
    %cst_10 = arith.constant 1.000000e-24 : f32
    %27 = vector.broadcast %cst_10 : f32 to vector<8x128xf32>
    %28 = arith.maximumf %10, %27 : vector<8x128xf32>
    %cst_11 = arith.constant 1.000000e-24 : f32
    %29 = vector.broadcast %cst_11 : f32 to vector<8x128xf32>
    %30 = arith.maximumf %18, %29 : vector<8x128xf32>
    %31 = arith.mulf %28, %30 : vector<8x128xf32>
    %32 = math.rsqrt %31 : vector<8x128xf32>
    %33 = arith.mulf %26, %32 : vector<8x128xf32>
    %c0_12 = arith.constant 0 : index
    %c0_13 = arith.constant 0 : index
    %34 = vector.load %arg3[%c0_12, %c0_13] : memref<8x128xf32, #tpu.memory_space<vmem>>, vector<8x128xf32>
    %c0_14 = arith.constant 0 : index
    %c0_15 = arith.constant 0 : index
    %35 = vector.load %arg4[%c0_14, %c0_15] : memref<8x128xf32, #tpu.memory_space<vmem>>, vector<8x128xf32>
    %36 = arith.mulf %34, %34 : vector<8x128xf32>
    %37 = arith.truncf %36 : vector<8x128xf32> to vector<8x128xbf16>
    %38 = arith.extf %37 : vector<8x128xbf16> to vector<8x128xf32>
    %39 = arith.subf %36, %38 : vector<8x128xf32>
    %40 = arith.truncf %39 : vector<8x128xf32> to vector<8x128xbf16>
    %cst_16 = arith.constant dense<0.000000e+00> : vector<8x128xf32>
    %41 = tpu.matmul %37, %0, %cst_16 {dimension_numbers = #tpu.dot_dimension_numbers<[1], [0], [0], [1], [0, 0, 1, 1], [], []>} : vector<8x128xbf16>, vector<128x128xbf16>, vector<8x128xf32> -> vector<8x128xf32>
    %cst_17 = arith.constant dense<0.000000e+00> : vector<8x128xf32>
    %42 = tpu.matmul %40, %0, %cst_17 {dimension_numbers = #tpu.dot_dimension_numbers<[1], [0], [0], [1], [0, 0, 1, 1], [], []>} : vector<8x128xbf16>, vector<128x128xbf16>, vector<8x128xf32> -> vector<8x128xf32>
    %43 = arith.addf %41, %42 : vector<8x128xf32>
    %44 = arith.mulf %35, %35 : vector<8x128xf32>
    %45 = arith.truncf %44 : vector<8x128xf32> to vector<8x128xbf16>
    %46 = arith.extf %45 : vector<8x128xbf16> to vector<8x128xf32>
    %47 = arith.subf %44, %46 : vector<8x128xf32>
    %48 = arith.truncf %47 : vector<8x128xf32> to vector<8x128xbf16>
    %cst_18 = arith.constant dense<0.000000e+00> : vector<8x128xf32>
    %49 = tpu.matmul %45, %0, %cst_18 {dimension_numbers = #tpu.dot_dimension_numbers<[1], [0], [0], [1], [0, 0, 1, 1], [], []>} : vector<8x128xbf16>, vector<128x128xbf16>, vector<8x128xf32> -> vector<8x128xf32>
    %cst_19 = arith.constant dense<0.000000e+00> : vector<8x128xf32>
    %50 = tpu.matmul %48, %0, %cst_19 {dimension_numbers = #tpu.dot_dimension_numbers<[1], [0], [0], [1], [0, 0, 1, 1], [], []>} : vector<8x128xbf16>, vector<128x128xbf16>, vector<8x128xf32> -> vector<8x128xf32>
    %51 = arith.addf %49, %50 : vector<8x128xf32>
    %52 = arith.mulf %34, %35 : vector<8x128xf32>
    %53 = arith.truncf %52 : vector<8x128xf32> to vector<8x128xbf16>
    %54 = arith.extf %53 : vector<8x128xbf16> to vector<8x128xf32>
    %55 = arith.subf %52, %54 : vector<8x128xf32>
    %56 = arith.truncf %55 : vector<8x128xf32> to vector<8x128xbf16>
    %cst_20 = arith.constant dense<0.000000e+00> : vector<8x128xf32>
    %57 = tpu.matmul %53, %0, %cst_20 {dimension_numbers = #tpu.dot_dimension_numbers<[1], [0], [0], [1], [0, 0, 1, 1], [], []>} : vector<8x128xbf16>, vector<128x128xbf16>, vector<8x128xf32> -> vector<8x128xf32>
    %cst_21 = arith.constant dense<0.000000e+00> : vector<8x128xf32>
    %58 = tpu.matmul %56, %0, %cst_21 {dimension_numbers = #tpu.dot_dimension_numbers<[1], [0], [0], [1], [0, 0, 1, 1], [], []>} : vector<8x128xbf16>, vector<128x128xbf16>, vector<8x128xf32> -> vector<8x128xf32>
    %59 = arith.addf %57, %58 : vector<8x128xf32>
    %cst_22 = arith.constant 1.000000e-24 : f32
    %60 = vector.broadcast %cst_22 : f32 to vector<8x128xf32>
    %61 = arith.maximumf %43, %60 : vector<8x128xf32>
    %cst_23 = arith.constant 1.000000e-24 : f32
    %62 = vector.broadcast %cst_23 : f32 to vector<8x128xf32>
    %63 = arith.maximumf %51, %62 : vector<8x128xf32>
    %64 = arith.mulf %61, %63 : vector<8x128xf32>
    %65 = math.rsqrt %64 : vector<8x128xf32>
    %66 = arith.mulf %59, %65 : vector<8x128xf32>
    %67 = arith.addf %33, %66 : vector<8x128xf32>
    %cst_24 = arith.constant dense<0.000000e+00> : vector<128xf32>
    %68 = vector.multi_reduction <add>, %67, %cst_24 [0] : vector<8x128xf32> to vector<128xf32>
    %69 = vector.shape_cast %68 : vector<128xf32> to vector<1x1x128xf32>
    %70 = vector.broadcast %69 : vector<1x1x128xf32> to vector<1x8x128xf32>
    %c0_25 = arith.constant 0 : index
    %c0_26 = arith.constant 0 : index
    %c0_27 = arith.constant 0 : index
    %71 = vector.load %arg6[%c0_25, %c0_26, %c0_27] : memref<1x8x128xf32, #tpu.memory_space<vmem>>, vector<1x8x128xf32>
    tpu.vector_store %arg6[%c0_25, %c0_26, %c0_27], %70 {strides = array<i32>} : memref<1x8x128xf32, #tpu.memory_space<vmem>>, vector<1x8x128xf32>,
    return
  }
  func.func @transform_0(%arg0: i32) -> (i32, i32) {
    %c0_i32 = arith.constant 0 : i32
    %c0_i32_0 = arith.constant 0 : i32
    return %arg0, %c0_i32 : i32, i32
  }
  func.func @transform_1(%arg0: i32) -> (i32, i32) {
    %c0_i32 = arith.constant 0 : i32
    %c0_i32_0 = arith.constant 0 : i32
    return %arg0, %c0_i32 : i32, i32
  }
  func.func @transform_2(%arg0: i32) -> (i32, i32) {
    %c0_i32 = arith.constant 0 : i32
    %c0_i32_0 = arith.constant 0 : i32
    return %arg0, %c0_i32 : i32, i32
  }
  func.func @transform_3(%arg0: i32) -> (i32, i32) {
    %c0_i32 = arith.constant 0 : i32
    %c0_i32_0 = arith.constant 0 : i32
    return %arg0, %c0_i32 : i32, i32
  }
  func.func @transform_4(%arg0: i32) -> (i32, i32) {
    %c0_i32 = arith.constant 0 : i32
    %c0_i32_0 = arith.constant 0 : i32
    %c0_i32_1 = arith.constant 0 : i32
    return %c0_i32, %c0_i32_0 : i32, i32
  }
  func.func @transform_5(%arg0: i32) -> (i32, i32, i32) {
    %c0_i32 = arith.constant 0 : i32
    %c0_i32_0 = arith.constant 0 : i32
    %c0_i32_1 = arith.constant 0 : i32
    return %arg0, %c0_i32, %c0_i32_0 : i32, i32, i32
  }
}

</mosaic_0001>

<llo_original>
// kernel: tpu_custom_call.1
$region0: #{tpu_custom_call.1}
  #allocation0 [shape = 'u32[]', space=smem, size = 0x4, offset = 0x4, fixed_abs, tag = 'smem constant byte address 0x4 - core index']
  #allocation1 [shape = 'u32[144,128]{1,0:T(1,128)}', space=vmem, size = 0x12000, scoped, tag = 'internal scratch']
  %s0 = inlined_call_operand.hbm [shape: f32[8,128], index: 0, kind: input, shape index: {}]
  %s1 = inlined_call_operand.hbm [shape: f32[8,128], index: 1, kind: input, shape index: {}]
  %s2 = inlined_call_operand.hbm [shape: f32[8,128], index: 2, kind: input, shape index: {}]
  %s3 = inlined_call_operand.hbm [shape: f32[8,128], index: 3, kind: input, shape index: {}]
  %s4 = inlined_call_operand.hbm [shape: bf16[128,128], index: 4, kind: input, shape index: {}]
  %s5 = inlined_call_operand.hbm [shape: f32[1,8,128], index: 5, kind: output, shape index: {}]
  %s6 = sld [smem:[#allocation0]]
  $region50: #{tpu_custom_call.1} parent=0
    _
  %s8 = ssub.s32 1, %s6
  %s9 = scalar_select 0, %s8, %s6
  $region1: #{tpu_custom_call.1} parent=0
    #allocation2 [shape = 'u8[4096]{0}', space=vmem, size = 0x1000, scoped, tag = 'input window, operand 0, single buffered']
    #allocation3 [shape = 's32[1]{0}', space=sflag, size = 0x4, scoped, tag = 'scoped memory for tpu_custom_call.1']
    #allocation4 [shape = 's32[1]{0}', space=sflag, size = 0x4, scoped, tag = 'scoped memory for tpu_custom_call.1']
    #allocation5 [shape = 'u8[4096]{0}', space=vmem, size = 0x1000, scoped, tag = 'input window, operand 1, single buffered']
    #allocation6 [shape = 's32[1]{0}', space=sflag, size = 0x4, scoped, tag = 'scoped memory for tpu_custom_call.1']
    #allocation7 [shape = 'u8[4096]{0}', space=vmem, size = 0x1000, scoped, tag = 'input window, operand 2, single buffered']
    #allocation8 [shape = 'u8[4096]{0}', space=vmem, size = 0x1000, scoped, tag = 'input window, operand 3, single buffered']
    #allocation9 [shape = 's32[1]{0}', space=sflag, size = 0x4, scoped, tag = 'scoped memory for tpu_custom_call.1']
    #allocation10 [shape = 'u8[32768]{0}', space=vmem, size = 0x8000, scoped, tag = 'input window, operand 4, single buffered']
    #allocation11 [shape = 'u8[4096]{0}', space=vmem, size = 0x1000, scoped, tag = 'output window, operand 0, single buffered']
    %10 = vsyncpa [#allocation3], 0
    %11 = vsyncpa [#allocation6], 0
    %12 = vsyncpa [#allocation9], 0
    %13 = vsyncpa [#allocation4], 0
    // Predicated region
    $region2: #{tpu_custom_call.1} parent=1 // pred_check
      _
    $region3: #{tpu_custom_call.1} parent=1 // pred_check_branch
      %15 = sbr.rel (0) target = $region5
    $region4: #{tpu_custom_call.1} parent=1 // pred_region
      %s17 = ssub.s32 128, 128
      %18 = vsyncadd [#allocation3], %s17
      %s20 = sshll.u32 [#allocation2], 4
      %s21 = int_to_ptr.vmem [resolvable:$true] %s20
      %23 = dma.hbm_to_vmem [thread:$0]  %s0, 128, %s21, [#allocation3]
    $region5: #{tpu_custom_call.1} parent=1 // pred_fallthru
      _
    // Predicated region
    $region6: #{tpu_custom_call.1} parent=1 // pred_check
      _
    $region7: #{tpu_custom_call.1} parent=1 // pred_check_branch
      %25 = sbr.rel (0) target = $region9
    $region8: #{tpu_custom_call.1} parent=1 // pred_region
      %s27 = ssub.s32 128, 128
      %28 = vsyncadd [#allocation6], %s27
      %s30 = sshll.u32 [#allocation5], 4
      %s31 = int_to_ptr.vmem [resolvable:$true] %s30
      %33 = dma.hbm_to_vmem [thread:$0]  %s1, 128, %s31, [#allocation6]
    $region9: #{tpu_custom_call.1} parent=1 // pred_fallthru
      _
    // Predicated region
    $region10: #{tpu_custom_call.1} parent=1 // pred_check
      _
    $region11: #{tpu_custom_call.1} parent=1 // pred_check_branch
      %35 = sbr.rel (0) target = $region13
    $region12: #{tpu_custom_call.1} parent=1 // pred_region
      %s37 = ssub.s32 128, 128
      %38 = vsyncadd [#allocation6], %s37
      %s40 = sshll.u32 [#allocation7], 4
      %s41 = int_to_ptr.vmem [resolvable:$true] %s40
      %43 = dma.hbm_to_vmem [thread:$0]  %s2, 128, %s41, [#allocation6]
    $region13: #{tpu_custom_call.1} parent=1 // pred_fallthru
      _
    // Predicated region
    $region14: #{tpu_custom_call.1} parent=1 // pred_check
      _
    $region15: #{tpu_custom_call.1} parent=1 // pred_check_branch
      %45 = sbr.rel (0) target = $region17
    $region16: #{tpu_custom_call.1} parent=1 // pred_region
      %s47 = ssub.s32 128, 128
      %48 = vsyncadd [#allocation9], %s47
      %s50 = sshll.u32 [#allocation8], 4
      %s51 = int_to_ptr.vmem [resolvable:$true] %s50
      %53 = dma.hbm_to_vmem [thread:$0]  %s3, 128, %s51, [#allocation9]
    $region17: #{tpu_custom_call.1} parent=1 // pred_fallthru
      _
    // Predicated region
    $region18: #{tpu_custom_call.1} parent=1 // pred_check
      _
    $region19: #{tpu_custom_call.1} parent=1 // pred_check_branch
      %55 = sbr.rel (0) target = $region21
    $region20: #{tpu_custom_call.1} parent=1 // pred_region
      %s57 = ssub.s32 1024, 1024
      %58 = vsyncadd [#allocation9], %s57
      %s59 = sshll.u32 [#allocation10], 4
      %s60 = int_to_ptr.vmem [resolvable:$true] %s59
      %65 = dma.hbm_to_vmem [thread:$0]  %s4, 1024, %s60, [#allocation9], 64, 64, 4
    $region21: #{tpu_custom_call.1} parent=1 // pred_fallthru
      _
    // Predicated region
    $region22: #{tpu_custom_call.1} parent=1 // pred_check
      _
    $region23: #{tpu_custom_call.1} parent=1 // pred_check_branch
      %67 = sbr.rel (0) target = $region25
    $region24: #{tpu_custom_call.1} parent=1 // pred_region
      %68 = dma.done [#allocation3], 128
    $region25: #{tpu_custom_call.1} parent=1 // pred_fallthru
      _
    // Predicated region
    $region26: #{tpu_custom_call.1} parent=1 // pred_check
      _
    $region27: #{tpu_custom_call.1} parent=1 // pred_check_branch
      %70 = sbr.rel (0) target = $region29
    $region28: #{tpu_custom_call.1} parent=1 // pred_region
      %71 = dma.done [#allocation6], 128
    $region29: #{tpu_custom_call.1} parent=1 // pred_fallthru
      _
    // Predicated region
    $region30: #{tpu_custom_call.1} parent=1 // pred_check
      _
    $region31: #{tpu_custom_call.1} parent=1 // pred_check_branch
      %73 = sbr.rel (0) target = $region33
    $region32: #{tpu_custom_call.1} parent=1 // pred_region
      %74 = dma.done [#allocation6], 128
    $region33: #{tpu_custom_call.1} parent=1 // pred_fallthru
      _
    // Predicated region
    $region34: #{tpu_custom_call.1} parent=1 // pred_check
      _
    $region35: #{tpu_custom_call.1} parent=1 // pred_check_branch
      %76 = sbr.rel (0) target = $region37
    $region36: #{tpu_custom_call.1} parent=1 // pred_region
      %77 = dma.done [#allocation9], 128
    $region37: #{tpu_custom_call.1} parent=1 // pred_fallthru
      _
    // Predicated region
    $region38: #{tpu_custom_call.1} parent=1 // pred_check
      _
    $region39: #{tpu_custom_call.1} parent=1 // pred_check_branch
      %79 = sbr.rel (0) target = $region41
    $region40: #{tpu_custom_call.1} parent=1 // pred_region
      %80 = dma.done [#allocation9], 1024
    $region41: #{tpu_custom_call.1} parent=1 // pred_fallthru
      _
    %v82 = vld [vmem:[#allocation10] sm:$0xf]
    %v83 = vld [vmem:[#allocation10 + $0x4] sm:$0xf]
    %v84 = vld [vmem:[#allocation10 + $0x8] sm:$0xf]
    %v85 = vld [vmem:[#allocation10 + $0xc] sm:$0xf]
    %v86 = vld [vmem:[#allocation10 + $0x10] sm:$0xf]
    %v87 = vld [vmem:[#allocation10 + $0x14] sm:$0xf]
    %v88 = vld [vmem:[#allocation10 + $0x18] sm:$0xf]
    %v89 = vld [vmem:[#allocation10 + $0x1c] sm:$0xf]
    %v90 = vld [vmem:[#allocation10 + $0x20] sm:$0xf]
    %v91 = vld [vmem:[#allocation10 + $0x24] sm:$0xf]
    %v92 = vld [vmem:[#allocation10 + $0x28] sm:$0xf]
    %v93 = vld [vmem:[#allocation10 + $0x2c] sm:$0xf]
    %v94 = vld [vmem:[#allocation10 + $0x30] sm:$0xf]
    %v95 = vld [vmem:[#allocation10 + $0x34] sm:$0xf]
    %v96 = vld [vmem:[#allocation10 + $0x38] sm:$0xf]
    %v97 = vld [vmem:[#allocation10 + $0x3c] sm:$0xf]
    %v98 = vld [vmem:[#allocation2] sm:$0xff]
    %v99 = vld [vmem:[#allocation5] sm:$0xff]
    %v100 = vmul.f32 %v98, %v98
    %v101 = vpack.c.bf16 %v100, %v100
    %v102 = vunpack.c.l.bf16 %v101
    %v103 = vsub.f32 %v100, %v102
    %v104 = vpack.c.bf16 %v103, %v103
    %v121 = vunpack.c.l.b16 %v82
    %v122 = vunpack.c.l.b16 %v83
    %v123 = vunpack.c.l.b16 %v84
    %v124 = vunpack.c.l.b16 %v85
    %v125 = vunpack.c.l.b16 %v86
    %v126 = vunpack.c.l.b16 %v87
    %v127 = vunpack.c.l.b16 %v88
    %v128 = vunpack.c.l.b16 %v89
    %v129 = vunpack.c.l.b16 %v90
    %v130 = vunpack.c.l.b16 %v91
    %v131 = vunpack.c.l.b16 %v92
    %v132 = vunpack.c.l.b16 %v93
    %v133 = vunpack.c.l.b16 %v94
    %v134 = vunpack.c.l.b16 %v95
    %v135 = vunpack.c.l.b16 %v96
    %v136 = vunpack.c.l.b16 %v97
    %v137 = vpack.c.b16 %v122, %v121
    %v138 = vpack.c.b16 %v124, %v123
    %v139 = vpack.c.b16 %v126, %v125
    %v140 = vpack.c.b16 %v128, %v127
    %v141 = vpack.c.b16 %v130, %v129
    %v142 = vpack.c.b16 %v132, %v131
    %v143 = vpack.c.b16 %v134, %v133
    %v144 = vpack.c.b16 %v136, %v135
    %153 = vmatprep.subr.bf16.mxu0 0
    %154 = vmatpush1.bf16.msra.mxu0 %v144
    %155 = vmatprep.subr.bf16.mxu0 0
    %156 = vmatpush1.bf16.msra.mxu0 %v143
    %157 = vmatprep.subr.bf16.mxu0 0
    %158 = vmatpush1.bf16.msra.mxu0 %v142
    %159 = vmatprep.subr.bf16.mxu0 0
    %160 = vmatpush1.bf16.msra.mxu0 %v141
    %161 = vmatprep.subr.bf16.mxu0 0
    %162 = vmatpush1.bf16.msra.mxu0 %v140
    %163 = vmatprep.subr.bf16.mxu0 0
    %164 = vmatpush1.bf16.msra.mxu0 %v139
    %165 = vmatprep.subr.bf16.mxu0 0
    %166 = vmatpush1.bf16.msra.mxu0 %v138
    %167 = vmatprep.subr.bf16.mxu0 0
    %168 = vmatpush1.bf16.msra.mxu0 %v137
    %169 = vmatprep.subr.bf16.mxu0 0
    %170 = vmatpush2.bf16.msra.mxu0 0
    %171 = vmatprep.subr.bf16.mxu0 0
    %172 = vmatpush2.bf16.msra.mxu0 0
    %173 = vmatprep.subr.bf16.mxu0 0
    %174 = vmatpush2.bf16.msra.mxu0 0
    %175 = vmatprep.subr.bf16.mxu0 0
    %176 = vmatpush2.bf16.msra.mxu0 0
    %177 = vmatprep.subr.bf16.mxu0 0
    %178 = vmatpush2.bf16.msra.mxu0 0
    %179 = vmatprep.subr.bf16.mxu0 0
    %180 = vmatpush2.bf16.msra.mxu0 0
    %181 = vmatprep.subr.bf16.mxu0 0
    %182 = vmatpush2.bf16.msra.mxu0 0
    %183 = vmatprep.subr.bf16.mxu0 0
    %184 = vmatpush2.bf16.msra.mxu0 0
    %185 = vmatprep.mubr.bf16.mxu0 0
    %186 = vmatmul.mubr.bf16.gmra.mxu0 %v104
    %v187 = vpop.f32.mrf.mxu0
    %v188 = vadd.f32 0.0, %v187
    %v189 = vpop.f32.mrf.mxu0
    %v190 = vpop.f32.mrf.mxu0
    %v191 = vpop.f32.mrf.mxu0
    %192 = vdwg.mxu0
    %193 = vmatprep.subr.bf16.mxu0 0
    %194 = vmatpush1.bf16.msra.mxu0 %v144
    %195 = vmatprep.subr.bf16.mxu0 0
    %196 = vmatpush1.bf16.msra.mxu0 %v143
    %197 = vmatprep.subr.bf16.mxu0 0
    %198 = vmatpush1.bf16.msra.mxu0 %v142
    %199 = vmatprep.subr.bf16.mxu0 0
    %200 = vmatpush1.bf16.msra.mxu0 %v141
    %201 = vmatprep.subr.bf16.mxu0 0
    %202 = vmatpush1.bf16.msra.mxu0 %v140
    %203 = vmatprep.subr.bf16.mxu0 0
    %204 = vmatpush1.bf16.msra.mxu0 %v139
    %205 = vmatprep.subr.bf16.mxu0 0
    %206 = vmatpush1.bf16.msra.mxu0 %v138
    %207 = vmatprep.subr.bf16.mxu0 0
    %208 = vmatpush1.bf16.msra.mxu0 %v137
    %209 = vmatprep.subr.bf16.mxu0 0
    %210 = vmatpush2.bf16.msra.mxu0 0
    %211 = vmatprep.subr.bf16.mxu0 0
    %212 = vmatpush2.bf16.msra.mxu0 0
    %213 = vmatprep.subr.bf16.mxu0 0
    %214 = vmatpush2.bf16.msra.mxu0 0
    %215 = vmatprep.subr.bf16.mxu0 0
    %216 = vmatpush2.bf16.msra.mxu0 0
    %217 = vmatprep.subr.bf16.mxu0 0
    %218 = vmatpush2.bf16.msra.mxu0 0
    %219 = vmatprep.subr.bf16.mxu0 0
    %220 = vmatpush2.bf16.msra.mxu0 0
    %221 = vmatprep.subr.bf16.mxu0 0
    %222 = vmatpush2.bf16.msra.mxu0 0
    %223 = vmatprep.subr.bf16.mxu0 0
    %224 = vmatpush2.bf16.msra.mxu0 0
    %225 = vmatprep.mubr.bf16.mxu0 0
    %226 = vmatmul.mubr.bf16.gmra.mxu0 %v101
    %v227 = vpop.f32.mrf.mxu0
    %v228 = vadd.f32 %v188, %v227
    %v229 = vpop.f32.mrf.mxu0
    %v230 = vpop.f32.mrf.mxu0
    %v231 = vpop.f32.mrf.mxu0
    %232 = vdwg.mxu0
    %v233 = vmul.f32 %v99, %v99
    %v234 = vpack.c.bf16 %v233, %v233
    %v235 = vunpack.c.l.bf16 %v234
    %v236 = vsub.f32 %v233, %v235
    %v237 = vpack.c.bf16 %v236, %v236
    %238 = vmatprep.subr.bf16.mxu0 0
    %239 = vmatpush1.bf16.msra.mxu0 %v144
    %240 = vmatprep.subr.bf16.mxu0 0
    %241 = vmatpush1.bf16.msra.mxu0 %v143
    %242 = vmatprep.subr.bf16.mxu0 0
    %243 = vmatpush1.bf16.msra.mxu0 %v142
    %244 = vmatprep.subr.bf16.mxu0 0
    %245 = vmatpush1.bf16.msra.mxu0 %v141
    %246 = vmatprep.subr.bf16.mxu0 0
    %247 = vmatpush1.bf16.msra.mxu0 %v140
    %248 = vmatprep.subr.bf16.mxu0 0
    %249 = vmatpush1.bf16.msra.mxu0 %v139
    %250 = vmatprep.subr.bf16.mxu0 0
    %251 = vmatpush1.bf16.msra.mxu0 %v138
    %252 = vmatprep.subr.bf16.mxu0 0
    %253 = vmatpush1.bf16.msra.mxu0 %v137
    %254 = vmatprep.subr.bf16.mxu0 0
    %255 = vmatpush2.bf16.msra.mxu0 0
    %256 = vmatprep.subr.bf16.mxu0 0
    %257 = vmatpush2.bf16.msra.mxu0 0
    %258 = vmatprep.subr.bf16.mxu0 0
    %259 = vmatpush2.bf16.msra.mxu0 0
    %260 = vmatprep.subr.bf16.mxu0 0
    %261 = vmatpush2.bf16.msra.mxu0 0
    %262 = vmatprep.subr.bf16.mxu0 0
    %263 = vmatpush2.bf16.msra.mxu0 0
    %264 = vmatprep.subr.bf16.mxu0 0
    %265 = vmatpush2.bf16.msra.mxu0 0
    %266 = vmatprep.subr.bf16.mxu0 0
    %267 = vmatpush2.bf16.msra.mxu0 0
    %268 = vmatprep.subr.bf16.mxu0 0
    %269 = vmatpush2.bf16.msra.mxu0 0
    %270 = vmatprep.mubr.bf16.mxu0 0
    %271 = vmatmul.mubr.bf16.gmra.mxu0 %v237
    %v272 = vpop.f32.mrf.mxu0
    %v273 = vadd.f32 0.0, %v272
    %v274 = vpop.f32.mrf.mxu0
    %v275 = vpop.f32.mrf.mxu0
    %v276 = vpop.f32.mrf.mxu0
    %277 = vdwg.mxu0
    %278 = vmatprep.subr.bf16.mxu0 0
    %279 = vmatpush1.bf16.msra.mxu0 %v144
    %280 = vmatprep.subr.bf16.mxu0 0
    %281 = vmatpush1.bf16.msra.mxu0 %v143
    %282 = vmatprep.subr.bf16.mxu0 0
    %283 = vmatpush1.bf16.msra.mxu0 %v142
    %284 = vmatprep.subr.bf16.mxu0 0
    %285 = vmatpush1.bf16.msra.mxu0 %v141
    %286 = vmatprep.subr.bf16.mxu0 0
    %287 = vmatpush1.bf16.msra.mxu0 %v140
    %288 = vmatprep.subr.bf16.mxu0 0
    %289 = vmatpush1.bf16.msra.mxu0 %v139
    %290 = vmatprep.subr.bf16.mxu0 0
    %291 = vmatpush1.bf16.msra.mxu0 %v138
    %292 = vmatprep.subr.bf16.mxu0 0
    %293 = vmatpush1.bf16.msra.mxu0 %v137
    %294 = vmatprep.subr.bf16.mxu0 0
    %295 = vmatpush2.bf16.msra.mxu0 0
    %296 = vmatprep.subr.bf16.mxu0 0
    %297 = vmatpush2.bf16.msra.mxu0 0
    %298 = vmatprep.subr.bf16.mxu0 0
    %299 = vmatpush2.bf16.msra.mxu0 0
    %300 = vmatprep.subr.bf16.mxu0 0
    %301 = vmatpush2.bf16.msra.mxu0 0
    %302 = vmatprep.subr.bf16.mxu0 0
    %303 = vmatpush2.bf16.msra.mxu0 0
    %304 = vmatprep.subr.bf16.mxu0 0
    %305 = vmatpush2.bf16.msra.mxu0 0
    %306 = vmatprep.subr.bf16.mxu0 0
    %307 = vmatpush2.bf16.msra.mxu0 0
    %308 = vmatprep.subr.bf16.mxu0 0
    %309 = vmatpush2.bf16.msra.mxu0 0
    %310 = vmatprep.mubr.bf16.mxu0 0
    %311 = vmatmul.mubr.bf16.gmra.mxu0 %v234
    %v312 = vpop.f32.mrf.mxu0
    %v313 = vadd.f32 %v273, %v312
    %v314 = vpop.f32.mrf.mxu0
    %v315 = vpop.f32.mrf.mxu0
    %v316 = vpop.f32.mrf.mxu0
    %317 = vdwg.mxu0
    %v318 = vmul.f32 %v98, %v99
    %v319 = vpack.c.bf16 %v318, %v318
    %v320 = vunpack.c.l.bf16 %v319
    %v321 = vsub.f32 %v318, %v320
    %v322 = vpack.c.bf16 %v321, %v321
    %323 = vmatprep.subr.bf16.mxu0 0
    %324 = vmatpush1.bf16.msra.mxu0 %v144
    %325 = vmatprep.subr.bf16.mxu0 0
    %326 = vmatpush1.bf16.msra.mxu0 %v143
    %327 = vmatprep.subr.bf16.mxu0 0
    %328 = vmatpush1.bf16.msra.mxu0 %v142
    %329 = vmatprep.subr.bf16.mxu0 0
    %330 = vmatpush1.bf16.msra.mxu0 %v141
    %331 = vmatprep.subr.bf16.mxu0 0
    %332 = vmatpush1.bf16.msra.mxu0 %v140
    %333 = vmatprep.subr.bf16.mxu0 0
    %334 = vmatpush1.bf16.msra.mxu0 %v139
    %335 = vmatprep.subr.bf16.mxu0 0
    %336 = vmatpush1.bf16.msra.mxu0 %v138
    %337 = vmatprep.subr.bf16.mxu0 0
    %338 = vmatpush1.bf16.msra.mxu0 %v137
    %339 = vmatprep.subr.bf16.mxu0 0
    %340 = vmatpush2.bf16.msra.mxu0 0
    %341 = vmatprep.subr.bf16.mxu0 0
    %342 = vmatpush2.bf16.msra.mxu0 0
    %343 = vmatprep.subr.bf16.mxu0 0
    %344 = vmatpush2.bf16.msra.mxu0 0
    %345 = vmatprep.subr.bf16.mxu0 0
    %346 = vmatpush2.bf16.msra.mxu0 0
    %347 = vmatprep.subr.bf16.mxu0 0
    %348 = vmatpush2.bf16.msra.mxu0 0
    %349 = vmatprep.subr.bf16.mxu0 0
    %350 = vmatpush2.bf16.msra.mxu0 0
    %351 = vmatprep.subr.bf16.mxu0 0
    %352 = vmatpush2.bf16.msra.mxu0 0
    %353 = vmatprep.subr.bf16.mxu0 0
    %354 = vmatpush2.bf16.msra.mxu0 0
    %355 = vmatprep.mubr.bf16.mxu0 0
    %356 = vmatmul.mubr.bf16.gmra.mxu0 %v322
    %v357 = vpop.f32.mrf.mxu0
    %v358 = vadd.f32 0.0, %v357
    %v359 = vpop.f32.mrf.mxu0
    %v360 = vpop.f32.mrf.mxu0
    %v361 = vpop.f32.mrf.mxu0
    %362 = vdwg.mxu0
    %363 = vmatprep.subr.bf16.mxu0 0
    %364 = vmatpush1.bf16.msra.mxu0 %v144
    %365 = vmatprep.subr.bf16.mxu0 0
    %366 = vmatpush1.bf16.msra.mxu0 %v143
    %367 = vmatprep.subr.bf16.mxu0 0
    %368 = vmatpush1.bf16.msra.mxu0 %v142
    %369 = vmatprep.subr.bf16.mxu0 0
    %370 = vmatpush1.bf16.msra.mxu0 %v141
    %371 = vmatprep.subr.bf16.mxu0 0
    %372 = vmatpush1.bf16.msra.mxu0 %v140
    %373 = vmatprep.subr.bf16.mxu0 0
    %374 = vmatpush1.bf16.msra.mxu0 %v139
    %375 = vmatprep.subr.bf16.mxu0 0
    %376 = vmatpush1.bf16.msra.mxu0 %v138
    %377 = vmatprep.subr.bf16.mxu0 0
    %378 = vmatpush1.bf16.msra.mxu0 %v137
    %379 = vmatprep.subr.bf16.mxu0 0
    %380 = vmatpush2.bf16.msra.mxu0 0
    %381 = vmatprep.subr.bf16.mxu0 0
    %382 = vmatpush2.bf16.msra.mxu0 0
    %383 = vmatprep.subr.bf16.mxu0 0
    %384 = vmatpush2.bf16.msra.mxu0 0
    %385 = vmatprep.subr.bf16.mxu0 0
    %386 = vmatpush2.bf16.msra.mxu0 0
    %387 = vmatprep.subr.bf16.mxu0 0
    %388 = vmatpush2.bf16.msra.mxu0 0
    %389 = vmatprep.subr.bf16.mxu0 0
    %390 = vmatpush2.bf16.msra.mxu0 0
    %391 = vmatprep.subr.bf16.mxu0 0
    %392 = vmatpush2.bf16.msra.mxu0 0
    %393 = vmatprep.subr.bf16.mxu0 0
    %394 = vmatpush2.bf16.msra.mxu0 0
    %395 = vmatprep.mubr.bf16.mxu0 0
    %396 = vmatmul.mubr.bf16.gmra.mxu0 %v319
    %v397 = vpop.f32.mrf.mxu0
    %v398 = vadd.f32 %v358, %v397
    %v399 = vpop.f32.mrf.mxu0
    %v400 = vpop.f32.mrf.mxu0
    %v401 = vpop.f32.mrf.mxu0
    %402 = vdwg.mxu0
    %v403 = vmax.f32 %v228, 1e-24
    %v404 = vmax.f32 %v313, 1e-24
    %v405 = vmul.f32 %v403, %v404
    %v406 = vrsqrt.pop %v405
    %v407 = vmul.f32 %v398, %v406
    %v408 = vld [vmem:[#allocation7] sm:$0xff]
    %v409 = vld [vmem:[#allocation8] sm:$0xff]
    %v410 = vmul.f32 %v408, %v408
    %v411 = vpack.c.bf16 %v410, %v410
    %v412 = vunpack.c.l.bf16 %v411
    %v413 = vsub.f32 %v410, %v412
    %v414 = vpack.c.bf16 %v413, %v413
    %415 = vmatprep.subr.bf16.mxu0 0
    %416 = vmatpush1.bf16.msra.mxu0 %v144
    %417 = vmatprep.subr.bf16.mxu0 0
    %418 = vmatpush1.bf16.msra.mxu0 %v143
    %419 = vmatprep.subr.bf16.mxu0 0
    %420 = vmatpush1.bf16.msra.mxu0 %v142
    %421 = vmatprep.subr.bf16.mxu0 0
    %422 = vmatpush1.bf16.msra.mxu0 %v141
    %423 = vmatprep.subr.bf16.mxu0 0
    %424 = vmatpush1.bf16.msra.mxu0 %v140
    %425 = vmatprep.subr.bf16.mxu0 0
    %426 = vmatpush1.bf16.msra.mxu0 %v139
    %427 = vmatprep.subr.bf16.mxu0 0
    %428 = vmatpush1.bf16.msra.mxu0 %v138
    %429 = vmatprep.subr.bf16.mxu0 0
    %430 = vmatpush1.bf16.msra.mxu0 %v137
    %431 = vmatprep.subr.bf16.mxu0 0
    %432 = vmatpush2.bf16.msra.mxu0 0
    %433 = vmatprep.subr.bf16.mxu0 0
    %434 = vmatpush2.bf16.msra.mxu0 0
    %435 = vmatprep.subr.bf16.mxu0 0
    %436 = vmatpush2.bf16.msra.mxu0 0
    %437 = vmatprep.subr.bf16.mxu0 0
    %438 = vmatpush2.bf16.msra.mxu0 0
    %439 = vmatprep.subr.bf16.mxu0 0
    %440 = vmatpush2.bf16.msra.mxu0 0
    %441 = vmatprep.subr.bf16.mxu0 0
    %442 = vmatpush2.bf16.msra.mxu0 0
    %443 = vmatprep.subr.bf16.mxu0 0
    %444 = vmatpush2.bf16.msra.mxu0 0
    %445 = vmatprep.subr.bf16.mxu0 0
    %446 = vmatpush2.bf16.msra.mxu0 0
    %447 = vmatprep.mubr.bf16.mxu0 0
    %448 = vmatmul.mubr.bf16.gmra.mxu0 %v414
    %v449 = vpop.f32.mrf.mxu0
    %v450 = vadd.f32 0.0, %v449
    %v451 = vpop.f32.mrf.mxu0
    %v452 = vpop.f32.mrf.mxu0
    %v453 = vpop.f32.mrf.mxu0
    %454 = vdwg.mxu0
    %455 = vmatprep.subr.bf16.mxu0 0
    %456 = vmatpush1.bf16.msra.mxu0 %v144
    %457 = vmatprep.subr.bf16.mxu0 0
    %458 = vmatpush1.bf16.msra.mxu0 %v143
    %459 = vmatprep.subr.bf16.mxu0 0
    %460 = vmatpush1.bf16.msra.mxu0 %v142
    %461 = vmatprep.subr.bf16.mxu0 0
    %462 = vmatpush1.bf16.msra.mxu0 %v141
    %463 = vmatprep.subr.bf16.mxu0 0
    %464 = vmatpush1.bf16.msra.mxu0 %v140
    %465 = vmatprep.subr.bf16.mxu0 0
    %466 = vmatpush1.bf16.msra.mxu0 %v139
    %467 = vmatprep.subr.bf16.mxu0 0
    %468 = vmatpush1.bf16.msra.mxu0 %v138
    %469 = vmatprep.subr.bf16.mxu0 0
    %470 = vmatpush1.bf16.msra.mxu0 %v137
    %471 = vmatprep.subr.bf16.mxu0 0
    %472 = vmatpush2.bf16.msra.mxu0 0
    %473 = vmatprep.subr.bf16.mxu0 0
    %474 = vmatpush2.bf16.msra.mxu0 0
    %475 = vmatprep.subr.bf16.mxu0 0
    %476 = vmatpush2.bf16.msra.mxu0 0
    %477 = vmatprep.subr.bf16.mxu0 0
    %478 = vmatpush2.bf16.msra.mxu0 0
    %479 = vmatprep.subr.bf16.mxu0 0
    %480 = vmatpush2.bf16.msra.mxu0 0
    %481 = vmatprep.subr.bf16.mxu0 0
    %482 = vmatpush2.bf16.msra.mxu0 0
    %483 = vmatprep.subr.bf16.mxu0 0
    %484 = vmatpush2.bf16.msra.mxu0 0
    %485 = vmatprep.subr.bf16.mxu0 0
    %486 = vmatpush2.bf16.msra.mxu0 0
    %487 = vmatprep.mubr.bf16.mxu0 0
    %488 = vmatmul.mubr.bf16.gmra.mxu0 %v411
    %v489 = vpop.f32.mrf.mxu0
    %v490 = vadd.f32 %v450, %v489
    %v491 = vpop.f32.mrf.mxu0
    %v492 = vpop.f32.mrf.mxu0
    %v493 = vpop.f32.mrf.mxu0
    %494 = vdwg.mxu0
    %v495 = vmul.f32 %v409, %v409
    %v496 = vpack.c.bf16 %v495, %v495
    %v497 = vunpack.c.l.bf16 %v496
    %v498 = vsub.f32 %v495, %v497
    %v499 = vpack.c.bf16 %v498, %v498
    %500 = vmatprep.subr.bf16.mxu0 0
    %501 = vmatpush1.bf16.msra.mxu0 %v144
    %502 = vmatprep.subr.bf16.mxu0 0
    %503 = vmatpush1.bf16.msra.mxu0 %v143
    %504 = vmatprep.subr.bf16.mxu0 0
    %505 = vmatpush1.bf16.msra.mxu0 %v142
    %506 = vmatprep.subr.bf16.mxu0 0
    %507 = vmatpush1.bf16.msra.mxu0 %v141
    %508 = vmatprep.subr.bf16.mxu0 0
    %509 = vmatpush1.bf16.msra.mxu0 %v140
    %510 = vmatprep.subr.bf16.mxu0 0
    %511 = vmatpush1.bf16.msra.mxu0 %v139
    %512 = vmatprep.subr.bf16.mxu0 0
    %513 = vmatpush1.bf16.msra.mxu0 %v138
    %514 = vmatprep.subr.bf16.mxu0 0
    %515 = vmatpush1.bf16.msra.mxu0 %v137
    %516 = vmatprep.subr.bf16.mxu0 0
    %517 = vmatpush2.bf16.msra.mxu0 0
    %518 = vmatprep.subr.bf16.mxu0 0
    %519 = vmatpush2.bf16.msra.mxu0 0
    %520 = vmatprep.subr.bf16.mxu0 0
    %521 = vmatpush2.bf16.msra.mxu0 0
    %522 = vmatprep.subr.bf16.mxu0 0
    %523 = vmatpush2.bf16.msra.mxu0 0
    %524 = vmatprep.subr.bf16.mxu0 0
    %525 = vmatpush2.bf16.msra.mxu0 0
    %526 = vmatprep.subr.bf16.mxu0 0
    %527 = vmatpush2.bf16.msra.mxu0 0
    %528 = vmatprep.subr.bf16.mxu0 0
    %529 = vmatpush2.bf16.msra.mxu0 0
    %530 = vmatprep.subr.bf16.mxu0 0
    %531 = vmatpush2.bf16.msra.mxu0 0
    %532 = vmatprep.mubr.bf16.mxu0 0
    %533 = vmatmul.mubr.bf16.gmra.mxu0 %v499
    %v534 = vpop.f32.mrf.mxu0
    %v535 = vadd.f32 0.0, %v534
    %v536 = vpop.f32.mrf.mxu0
    %v537 = vpop.f32.mrf.mxu0
    %v538 = vpop.f32.mrf.mxu0
    %539 = vdwg.mxu0
    %540 = vmatprep.subr.bf16.mxu0 0
    %541 = vmatpush1.bf16.msra.mxu0 %v144
    %542 = vmatprep.subr.bf16.mxu0 0
    %543 = vmatpush1.bf16.msra.mxu0 %v143
    %544 = vmatprep.subr.bf16.mxu0 0
    %545 = vmatpush1.bf16.msra.mxu0 %v142
    %546 = vmatprep.subr.bf16.mxu0 0
    %547 = vmatpush1.bf16.msra.mxu0 %v141
    %548 = vmatprep.subr.bf16.mxu0 0
    %549 = vmatpush1.bf16.msra.mxu0 %v140
    %550 = vmatprep.subr.bf16.mxu0 0
    %551 = vmatpush1.bf16.msra.mxu0 %v139
    %552 = vmatprep.subr.bf16.mxu0 0
    %553 = vmatpush1.bf16.msra.mxu0 %v138
    %554 = vmatprep.subr.bf16.mxu0 0
    %555 = vmatpush1.bf16.msra.mxu0 %v137
    %556 = vmatprep.subr.bf16.mxu0 0
    %557 = vmatpush2.bf16.msra.mxu0 0
    %558 = vmatprep.subr.bf16.mxu0 0
    %559 = vmatpush2.bf16.msra.mxu0 0
    %560 = vmatprep.subr.bf16.mxu0 0
    %561 = vmatpush2.bf16.msra.mxu0 0
    %562 = vmatprep.subr.bf16.mxu0 0
    %563 = vmatpush2.bf16.msra.mxu0 0
    %564 = vmatprep.subr.bf16.mxu0 0
    %565 = vmatpush2.bf16.msra.mxu0 0
    %566 = vmatprep.subr.bf16.mxu0 0
    %567 = vmatpush2.bf16.msra.mxu0 0
    %568 = vmatprep.subr.bf16.mxu0 0
    %569 = vmatpush2.bf16.msra.mxu0 0
    %570 = vmatprep.subr.bf16.mxu0 0
    %571 = vmatpush2.bf16.msra.mxu0 0
    %572 = vmatprep.mubr.bf16.mxu0 0
    %573 = vmatmul.mubr.bf16.gmra.mxu0 %v496
    %v574 = vpop.f32.mrf.mxu0
    %v575 = vadd.f32 %v535, %v574
    %v576 = vpop.f32.mrf.mxu0
    %v577 = vpop.f32.mrf.mxu0
    %v578 = vpop.f32.mrf.mxu0
    %579 = vdwg.mxu0
    %v580 = vmul.f32 %v408, %v409
    %v581 = vpack.c.bf16 %v580, %v580
    %v582 = vunpack.c.l.bf16 %v581
    %v583 = vsub.f32 %v580, %v582
    %v584 = vpack.c.bf16 %v583, %v583
    %585 = vmatprep.subr.bf16.mxu0 0
    %586 = vmatpush1.bf16.msra.mxu0 %v144
    %587 = vmatprep.subr.bf16.mxu0 0
    %588 = vmatpush1.bf16.msra.mxu0 %v143
    %589 = vmatprep.subr.bf16.mxu0 0
    %590 = vmatpush1.bf16.msra.mxu0 %v142
    %591 = vmatprep.subr.bf16.mxu0 0
    %592 = vmatpush1.bf16.msra.mxu0 %v141
    %593 = vmatprep.subr.bf16.mxu0 0
    %594 = vmatpush1.bf16.msra.mxu0 %v140
    %595 = vmatprep.subr.bf16.mxu0 0
    %596 = vmatpush1.bf16.msra.mxu0 %v139
    %597 = vmatprep.subr.bf16.mxu0 0
    %598 = vmatpush1.bf16.msra.mxu0 %v138
    %599 = vmatprep.subr.bf16.mxu0 0
    %600 = vmatpush1.bf16.msra.mxu0 %v137
    %601 = vmatprep.subr.bf16.mxu0 0
    %602 = vmatpush2.bf16.msra.mxu0 0
    %603 = vmatprep.subr.bf16.mxu0 0
    %604 = vmatpush2.bf16.msra.mxu0 0
    %605 = vmatprep.subr.bf16.mxu0 0
    %606 = vmatpush2.bf16.msra.mxu0 0
    %607 = vmatprep.subr.bf16.mxu0 0
    %608 = vmatpush2.bf16.msra.mxu0 0
    %609 = vmatprep.subr.bf16.mxu0 0
    %610 = vmatpush2.bf16.msra.mxu0 0
    %611 = vmatprep.subr.bf16.mxu0 0
    %612 = vmatpush2.bf16.msra.mxu0 0
    %613 = vmatprep.subr.bf16.mxu0 0
    %614 = vmatpush2.bf16.msra.mxu0 0
    %615 = vmatprep.subr.bf16.mxu0 0
    %616 = vmatpush2.bf16.msra.mxu0 0
    %617 = vmatprep.mubr.bf16.mxu0 0
    %618 = vmatmul.mubr.bf16.gmra.mxu0 %v584
    %v619 = vpop.f32.mrf.mxu0
    %v620 = vadd.f32 0.0, %v619
    %v621 = vpop.f32.mrf.mxu0
    %v622 = vpop.f32.mrf.mxu0
    %v623 = vpop.f32.mrf.mxu0
    %624 = vdwg.mxu0
    %625 = vmatprep.subr.bf16.mxu0 0
    %626 = vmatpush1.bf16.msra.mxu0 %v144
    %627 = vmatprep.subr.bf16.mxu0 0
    %628 = vmatpush1.bf16.msra.mxu0 %v143
    %629 = vmatprep.subr.bf16.mxu0 0
    %630 = vmatpush1.bf16.msra.mxu0 %v142
    %631 = vmatprep.subr.bf16.mxu0 0
    %632 = vmatpush1.bf16.msra.mxu0 %v141
    %633 = vmatprep.subr.bf16.mxu0 0
    %634 = vmatpush1.bf16.msra.mxu0 %v140
    %635 = vmatprep.subr.bf16.mxu0 0
    %636 = vmatpush1.bf16.msra.mxu0 %v139
    %637 = vmatprep.subr.bf16.mxu0 0
    %638 = vmatpush1.bf16.msra.mxu0 %v138
    %639 = vmatprep.subr.bf16.mxu0 0
    %640 = vmatpush1.bf16.msra.mxu0 %v137
    %641 = vmatprep.subr.bf16.mxu0 0
    %642 = vmatpush2.bf16.msra.mxu0 0
    %643 = vmatprep.subr.bf16.mxu0 0
    %644 = vmatpush2.bf16.msra.mxu0 0
    %645 = vmatprep.subr.bf16.mxu0 0
    %646 = vmatpush2.bf16.msra.mxu0 0
    %647 = vmatprep.subr.bf16.mxu0 0
    %648 = vmatpush2.bf16.msra.mxu0 0
    %649 = vmatprep.subr.bf16.mxu0 0
    %650 = vmatpush2.bf16.msra.mxu0 0
    %651 = vmatprep.subr.bf16.mxu0 0
    %652 = vmatpush2.bf16.msra.mxu0 0
    %653 = vmatprep.subr.bf16.mxu0 0
    %654 = vmatpush2.bf16.msra.mxu0 0
    %655 = vmatprep.subr.bf16.mxu0 0
    %656 = vmatpush2.bf16.msra.mxu0 0
    %657 = vmatprep.mubr.bf16.mxu0 0
    %658 = vmatmul.mubr.bf16.gmra.mxu0 %v581
    %v659 = vpop.f32.mrf.mxu0
    %v660 = vadd.f32 %v620, %v659
    %v661 = vpop.f32.mrf.mxu0
    %v662 = vpop.f32.mrf.mxu0
    %v663 = vpop.f32.mrf.mxu0
    %664 = vdwg.mxu0
    %v665 = vmax.f32 %v490, 1e-24
    %v666 = vmax.f32 %v575, 1e-24
    %v667 = vmul.f32 %v665, %v666
    %v668 = vrsqrt.pop %v667
    %v669 = vmul.f32 %v660, %v668
    %v670 = vadd.f32 %v407, %v669
    %v671 = vrot.slane %v670, 4
    %v672 = vadd.f32 %v670, %v671
    %v673 = vrot.slane %v672, 2
    %v674 = vadd.f32 %v672, %v673
    %v675 = vrot.slane %v674, 1
    %v676 = vadd.f32 %v674, %v675
    %677 = vst [vmem:[#allocation11] sm:$0xff] %v676
    // Predicated region
    $region42: #{tpu_custom_call.1} parent=1 // pred_check
      _
    $region43: #{tpu_custom_call.1} parent=1 // pred_check_branch
      %679 = sbr.rel (0) target = $region45
    $region44: #{tpu_custom_call.1} parent=1 // pred_region
      %s681 = ssub.s32 128, 128
      %682 = vsyncadd [#allocation4], %s681
      %s684 = sshll.u32 [#allocation11], 4
      %s685 = int_to_ptr.vmem [resolvable:$true] %s684
      %687 = dma.vmem_to_hbm [thread:$0]  %s685, 128, %s5, [#allocation4]
    $region45: #{tpu_custom_call.1} parent=1 // pred_fallthru
      _
    // Predicated region
    $region46: #{tpu_custom_call.1} parent=1 // pred_check
      _
    $region47: #{tpu_custom_call.1} parent=1 // pred_check_branch
      %689 = sbr.rel (0) target = $region49
    $region48: #{tpu_custom_call.1} parent=1 // pred_region
      %690 = dma.done [#allocation4], 128
    $region49: #{tpu_custom_call.1} parent=1 // pred_fallthru
      _
    %691 = vsyncpa [#allocation3], 1
    %692 = vsyncpa [#allocation6], 1
    %693 = vsyncpa [#allocation9], 1
    %694 = vsyncpa [#allocation4], 1

</llo_original>
